<compile_context>
chip_gen: v7x
topology: tpu7x:2x2x1
jax: 0.10.0
libtpu: 0.0.40
codegen_flags: <defaults>
</compile_context>

<pallas_src>
import jax
import jax.numpy as jnp
from jax.experimental import pallas as pl
from jax.experimental.pallas import tpu as pltpu

# ---- module constants (from ODEFunc.__init__) -------------------------------
K_PD = 1.0
K_VCO = 1.0
TAU_P = 0.9
TAU_Z1 = 0.4
TAU_Z2 = 0.4
OMEGA = 2.0
K_F = 1.01
COEFF = (TAU_Z1 - TAU_P) * (TAU_P - TAU_Z2) / TAU_P ** 2
COEFF_2 = TAU_Z1 * TAU_Z2 / TAU_P * K_PD

HIDDEN = 32
MAX_TB = 4096          # batch tile (lanes); multiple of 128

# Packed parameter slab layout, shape (PROWS, PCOLS) f32:
#   [0:32,  0:32]  = w2 (32, 32)
#   [0:32, 32:35]  = w1 (32, 3)
#   [0:32, 35:36]  = b1 (32, 1)
#   [0:32, 36:37]  = b2 (32, 1)
#   [32:35, 0:32]  = w3 (3, 32)
#   [32:35, 36:37] = b3 (3, 1)
PROWS = 40
PCOLS = 40


# ---- Pallas kernel -----------------------------------------------------------
def odefunc_kernel(y_ref, p_ref, out_ref):
    # y_ref: (3, TB) feature-major, batch on lanes.
    y0 = y_ref[0:1, :]                  # (1, TB)
    y1 = y_ref[1:2, :]                  # (1, TB)
    y2 = y_ref[2:3, :]                  # (1, TB)
    sin_y2 = jnp.sin(y2)

    # feature construction (s, v, d) on the VPU
    s = K_PD * sin_y2
    v = (-1.0 / TAU_P) * y1 + (COEFF * K_PD) * sin_y2
    d = OMEGA - (K_F * K_VCO) * (y0 + y1 + COEFF_2 * sin_y2)

    # unpack the resident parameter slab (static slices -> cheap views)
    w1 = p_ref[0:HIDDEN, 32:35]                 # (32, 3)
    b1 = p_ref[0:HIDDEN, 35:36]                 # (32, 1)
    w2 = p_ref[0:HIDDEN, 0:HIDDEN]              # (32, 32)
    b2 = p_ref[0:HIDDEN, 36:37]                 # (32, 1)
    w3 = p_ref[HIDDEN:HIDDEN + 3, 0:HIDDEN]     # (3, 32)
    b3 = p_ref[HIDDEN:HIDDEN + 3, 36:37]        # (3, 1)

    # Layer 1 (3 -> 32): three broadcasted rank-1 updates on the VPU.
    h1 = jnp.tanh(
        w1[:, 0:1] * s + w1[:, 1:2] * v + w1[:, 2:3] * d + b1
    )                                   # (32, TB)

    # Layer 2 (32 -> 32) on the MXU, batch on lanes (full-width N).
    h2 = jnp.tanh(
        jnp.dot(w2, h1, preferred_element_type=jnp.float32) + b2
    )                                   # (32, TB)

    # Layer 3 (32 -> 3); output store is lane-dense (TB multiple of 128).
    out_ref[...] = (
        jnp.dot(w3, h2, preferred_element_type=jnp.float32) + b3
    )                                   # (3, TB)


# ---- helpers -----------------------------------------------------------------
def _round_up(x, m):
    return (x + m - 1) // m * m


def _num_tensorcores():
    # v7x exposes 2 TensorCores per chip; v4/v5e/v6e effectively 1 here.
    try:
        kind = jax.devices()[0].device_kind.lower()
    except Exception:
        return 1
    return 2 if ("v7" in kind or "tpu7" in kind or "7x" in kind) else 1


def _choose_tiling(batch, ncores):
    b128 = _round_up(max(int(batch), 1), 128)
    if ncores > 1:
        # size the tile from ceil(B/ncores) so the grid has >= ncores steps
        tb = _round_up(pl.cdiv(b128, ncores), 128)
    else:
        tb = b128
    tb = min(MAX_TB, tb)
    b_pad = _round_up(max(int(batch), 1), tb)
    return tb, b_pad


def _odefunc_pallas(yT, slab, tb):
    """yT: (3, b_pad) f32 with b_pad % tb == 0. Returns (3, b_pad) f32."""
    b_pad = yT.shape[1]
    grid = b_pad // tb
    ncores = _num_tensorcores()
    # Only CORE_PARALLEL actually changes codegen; use it when a 2-TC chip can
    # shard the batch axis. Plain "parallel" is a safe no-op elsewhere.
    sem = (pltpu.CORE_PARALLEL,) if (ncores > 1 and grid > 1) else ("parallel",)

    cost = pl.CostEstimate(
        flops=int(b_pad) * (2 * 3 * HIDDEN + 2 * HIDDEN * HIDDEN + 2 * HIDDEN * 3 + 20),
        transcendentals=int(b_pad) * (2 * HIDDEN + 1),
        bytes_accessed=int(b_pad) * 24 + PROWS * PCOLS * 4,
    )

    return pl.pallas_call(
        odefunc_kernel,
        out_shape=jax.ShapeDtypeStruct((3, b_pad), jnp.float32),
        grid=(grid,),
        in_specs=[
            pl.BlockSpec((3, tb), lambda i: (0, i)),          # y tile (batch on lanes)
            pl.BlockSpec((PROWS, PCOLS), lambda i: (0, 0)),   # resident packed params
        ],
        out_specs=pl.BlockSpec((3, tb), lambda i: (0, i)),
        compiler_params=pltpu.CompilerParams(dimension_semantics=sem),
        cost_estimate=cost,
    )(yT, slab)


def pack_params(params):
    """Pack (w1,b1,w2,b2,w3,b3) into one resident (PROWS, PCOLS) slab.
    Do this ONCE, outside the ODE-solver loop."""
    w1, b1, w2, b2, w3, b3 = params
    slab = jnp.zeros((PROWS, PCOLS), jnp.float32)
    slab = slab.at[0:HIDDEN, 0:HIDDEN].set(w2.astype(jnp.float32))
    slab = slab.at[0:HIDDEN, 32:35].set(w1.astype(jnp.float32))
    slab = slab.at[0:HIDDEN, 35:36].set(b1.reshape(HIDDEN, 1).astype(jnp.float32))
    slab = slab.at[0:HIDDEN, 36:37].set(b2.reshape(HIDDEN, 1).astype(jnp.float32))
    slab = slab.at[HIDDEN:HIDDEN + 3, 0:HIDDEN].set(w3.astype(jnp.float32))
    slab = slab.at[HIDDEN:HIDDEN + 3, 36:37].set(b3.reshape(3, 1).astype(jnp.float32))
    return slab


# ---- public entry points -----------------------------------------------------
def odefunc_rhs_packed(t, yT, slab):
    """Feature-major fast path for ODE solvers: yT is (3, B) with B ideally
    already a multiple of 128 (then the pad/slice below are no-ops); returns
    dy/dt in the same (3, B) layout. Avoids per-step transpose/pad HBM passes."""
    del t
    Bp = yT.shape[1]
    tb, b_pad = _choose_tiling(Bp, _num_tensorcores())
    yT = yT.astype(jnp.float32)
    if b_pad != Bp:
        yT = jnp.pad(yT, ((0, 0), (0, b_pad - Bp)))
    out = _odefunc_pallas(yT, slab, tb)
    return out[:, :Bp]


def odefunc_forward(t, y, params, *, tb=None):
    """Matches ODEFunc.forward: y is (B, 3) or (B, 1, 3); t is unused.
    `params` may be the 6-tuple (w1,b1,w2,b2,w3,b3) or an already-packed slab."""
    del t
    slab = params if getattr(params, "ndim", 0) == 2 else pack_params(params)
    squeeze_mid = (y.ndim == 3)
    y2d = (y[:, 0, :] if squeeze_mid else y).astype(jnp.float32)
    B = y2d.shape[0]
    if tb is None:
        tb, b_pad = _choose_tiling(B, _num_tensorcores())
    else:
        b_pad = _round_up(B, tb)
    yT = jnp.pad(y2d.T, ((0, 0), (0, b_pad - B)))      # pad, not scatter-into-zeros
    outT = _odefunc_pallas(yT, slab, tb)
    out = outT[:, :B].T                                 # (B, 3)
    if squeeze_mid:
        out = out.reshape(B, 1, 3)
    return out


def init_params(key):
    """nn.init.normal_(weight, std=0.1), bias = 0; weights stored (out, in)."""
    k1, k2, k3 = jax.random.split(key, 3)
    w1 = 0.1 * jax.random.normal(k1, (HIDDEN, 3), dtype=jnp.float32)
    b1 = jnp.zeros((HIDDEN, 1), dtype=jnp.float32)
    w2 = 0.1 * jax.random.normal(k2, (HIDDEN, HIDDEN), dtype=jnp.float32)
    b2 = jnp.zeros((HIDDEN, 1), dtype=jnp.float32)
    w3 = 0.1 * jax.random.normal(k3, (3, HIDDEN), dtype=jnp.float32)
    b3 = jnp.zeros((3, 1), dtype=jnp.float32)
    return (w1, b1, w2, b2, w3, b3)


# pure-JAX reference for a quick sanity check
def _ref_forward(t, y, params):
    del t
    w1, b1, w2, b2, w3, b3 = params
    squeeze_mid = (y.ndim == 3)
    y2d = y[:, 0, :] if squeeze_mid else y
    sin_y2 = jnp.sin(y2d[:, 2:3])
    s = K_PD * sin_y2
    v = (-1.0 / TAU_P) * y2d[:, 1:2] + (COEFF * K_PD) * sin_y2
    d = OMEGA - (K_F * K_VCO) * (y2d[:, 0:1] + y2d[:, 1:2] + COEFF_2 * sin_y2)
    a = jnp.concatenate([s, v, d], axis=1)
    h1 = jnp.tanh(a @ w1.T + b1.T)
    h2 = jnp.tanh(h1 @ w2.T + b2.T)
    out = h2 @ w3.T + b3.T
    if squeeze_mid:
        out = out.reshape(-1, 1, 3)
    return out


if __name__ == "__main__":
    key = jax.random.PRNGKey(0)
    kp, ky, ky2 = jax.random.split(key, 3)
    params = init_params(kp)
    slab = pack_params(params)          # pack once (as an ODE loop would)
    t = jnp.float32(0.0)

    # small batch, both (B, 3) and (B, 1, 3) input forms
    B = 8
    y_2d = jax.random.normal(ky, (B, 3), dtype=jnp.float32)
    y_3d = y_2d.reshape(B, 1, 3)

    out_2d = jax.block_until_ready(odefunc_forward(t, y_2d, slab))
    out_3d = jax.block_until_ready(odefunc_forward(t, y_3d, params))

    ref_2d = _ref_forward(t, y_2d, params)
    assert out_2d.shape == (B, 3)
    assert out_3d.shape == (B, 1, 3)
    assert jnp.allclose(out_2d, ref_2d, atol=1e-5, rtol=1e-5)
    assert jnp.allclose(out_3d, ref_2d.reshape(B, 1, 3), atol=1e-5, rtol=1e-5)

    # multi-tile (grid > 1) pipelined path via an explicit small tile override
    Bb = 640
    y_big = jax.random.normal(ky2, (Bb, 3), dtype=jnp.float32)
    out_big = jax.block_until_ready(odefunc_forward(t, y_big, slab, tb=128))
    assert out_big.shape == (Bb, 3)
    assert jnp.allclose(out_big, _ref_forward(t, y_big, params), atol=1e-5, rtol=1e-5)

    # feature-major fast path (what an ODE solver step would call)
    BpT = 128
    yT = jnp.pad(y_2d.T, ((0, 0), (0, BpT - B)))
    dyT = jax.block_until_ready(odefunc_rhs_packed(t, yT, slab))
    assert dyT.shape == (3, BpT)
    assert jnp.allclose(dyT[:, :B].T, ref_2d, atol=1e-5, rtol=1e-5)

    print("KERNEL_OK")
</pallas_src>

<mosaic_0001>
module attributes {stable_mosaic.version = 11 : i64} {
  func.func @odefunc_kernel(%arg0: i32, %arg1: memref<3x128xf32, #tpu.memory_space<vmem>>, %arg2: memref<40x40xf32, #tpu.memory_space<vmem>>, %arg3: memref<3x128xf32, #tpu.memory_space<vmem>>) attributes {dimension_semantics = [#tpu.dimension_semantics<parallel>], iteration_bounds = array<i64: 1>, scalar_prefetch = 0 : i64, scratch_operands = 0 : i64, tpu.core_type = #tpu.core_type<tc>, window_params = [{transform_indices = @transform_0, window_bounds = array<i64: 3, 128>}, {pipeline_mode = #tpu.pipeline_mode<synchronous>, transform_indices = @transform_1, window_bounds = array<i64: 40, 40>}, {transform_indices = @transform_2, window_bounds = array<i64: 3, 128>}]} {
    %c0 = arith.constant 0 : index
    %c0_0 = arith.constant 0 : index
    %0 = vector.load %arg1[%c0, %c0_0] : memref<3x128xf32, #tpu.memory_space<vmem>>, vector<1x128xf32>
    %c1 = arith.constant 1 : index
    %c0_1 = arith.constant 0 : index
    %1 = vector.load %arg1[%c1, %c0_1] : memref<3x128xf32, #tpu.memory_space<vmem>>, vector<1x128xf32>
    %c2 = arith.constant 2 : index
    %c0_2 = arith.constant 0 : index
    %2 = vector.load %arg1[%c2, %c0_2] : memref<3x128xf32, #tpu.memory_space<vmem>>, vector<1x128xf32>
    %3 = math.sin %2 : vector<1x128xf32>
    %cst = arith.constant 1.000000e+00 : f32
    %4 = vector.broadcast %cst : f32 to vector<1x128xf32>
    %5 = arith.mulf %4, %3 : vector<1x128xf32>
    %cst_3 = arith.constant -1.11111116 : f32
    %6 = vector.broadcast %cst_3 : f32 to vector<1x128xf32>
    %7 = arith.mulf %6, %1 : vector<1x128xf32>
    %cst_4 = arith.constant -0.30864197 : f32
    %8 = vector.broadcast %cst_4 : f32 to vector<1x128xf32>
    %9 = arith.mulf %8, %3 : vector<1x128xf32>
    %10 = arith.addf %7, %9 : vector<1x128xf32>
    %11 = arith.addf %0, %1 : vector<1x128xf32>
    %cst_5 = arith.constant 0.177777782 : f32
    %12 = vector.broadcast %cst_5 : f32 to vector<1x128xf32>
    %13 = arith.mulf %12, %3 : vector<1x128xf32>
    %14 = arith.addf %11, %13 : vector<1x128xf32>
    %cst_6 = arith.constant 1.010000e+00 : f32
    %15 = vector.broadcast %cst_6 : f32 to vector<1x128xf32>
    %16 = arith.mulf %15, %14 : vector<1x128xf32>
    %cst_7 = arith.constant 2.000000e+00 : f32
    %17 = vector.broadcast %cst_7 : f32 to vector<1x128xf32>
    %18 = arith.subf %17, %16 : vector<1x128xf32>
    %c0_8 = arith.constant 0 : index
    %c32 = arith.constant 32 : index
    %19 = vector.load %arg2[%c0_8, %c32] : memref<40x40xf32, #tpu.memory_space<vmem>>, vector<32x3xf32>
    %c0_9 = arith.constant 0 : index
    %c35 = arith.constant 35 : index
    %20 = vector.load %arg2[%c0_9, %c35] : memref<40x40xf32, #tpu.memory_space<vmem>>, vector<32x1xf32>
    %c0_10 = arith.constant 0 : index
    %c0_11 = arith.constant 0 : index
    %21 = vector.load %arg2[%c0_10, %c0_11] : memref<40x40xf32, #tpu.memory_space<vmem>>, vector<32x32xf32>
    %c0_12 = arith.constant 0 : index
    %c36 = arith.constant 36 : index
    %22 = vector.load %arg2[%c0_12, %c36] : memref<40x40xf32, #tpu.memory_space<vmem>>, vector<32x1xf32>
    %c32_13 = arith.constant 32 : index
    %c0_14 = arith.constant 0 : index
    %23 = vector.load %arg2[%c32_13, %c0_14] : memref<40x40xf32, #tpu.memory_space<vmem>>, vector<3x32xf32>
    %c32_15 = arith.constant 32 : index
    %c36_16 = arith.constant 36 : index
    %24 = vector.load %arg2[%c32_15, %c36_16] : memref<40x40xf32, #tpu.memory_space<vmem>>, vector<3x1xf32>
    %25 = vector.extract_strided_slice %19 {offsets = [0, 0], sizes = [32, 1], strides = [1, 1]} : vector<32x3xf32> to vector<32x1xf32>
    %26 = vector.broadcast %25 : vector<32x1xf32> to vector<32x128xf32>
    %27 = vector.broadcast %5 : vector<1x128xf32> to vector<32x128xf32>
    %28 = arith.mulf %26, %27 : vector<32x128xf32>
    %29 = vector.extract_strided_slice %19 {offsets = [0, 1], sizes = [32, 1], strides = [1, 1]} : vector<32x3xf32> to vector<32x1xf32>
    %30 = vector.broadcast %29 : vector<32x1xf32> to vector<32x128xf32>
    %31 = vector.broadcast %10 : vector<1x128xf32> to vector<32x128xf32>
    %32 = arith.mulf %30, %31 : vector<32x128xf32>
    %33 = arith.addf %28, %32 : vector<32x128xf32>
    %34 = vector.extract_strided_slice %19 {offsets = [0, 2], sizes = [32, 1], strides = [1, 1]} : vector<32x3xf32> to vector<32x1xf32>
    %35 = vector.broadcast %34 : vector<32x1xf32> to vector<32x128xf32>
    %36 = vector.broadcast %18 : vector<1x128xf32> to vector<32x128xf32>
    %37 = arith.mulf %35, %36 : vector<32x128xf32>
    %38 = arith.addf %33, %37 : vector<32x128xf32>
    %39 = vector.broadcast %20 : vector<32x1xf32> to vector<32x128xf32>
    %40 = arith.addf %38, %39 : vector<32x128xf32>
    %41 = math.tanh %40 : vector<32x128xf32>
    %cst_17 = arith.constant dense<0.000000e+00> : vector<32x128xf32>
    %42 = tpu.matmul %21, %41, %cst_17 {dimension_numbers = #tpu.dot_dimension_numbers<[1], [0], [0], [1], [0, 0, 1, 1], [], []>} : vector<32x32xf32>, vector<32x128xf32>, vector<32x128xf32> -> vector<32x128xf32>
    %43 = vector.broadcast %22 : vector<32x1xf32> to vector<32x128xf32>
    %44 = arith.addf %42, %43 : vector<32x128xf32>
    %45 = math.tanh %44 : vector<32x128xf32>
    %cst_18 = arith.constant dense<0.000000e+00> : vector<3x128xf32>
    %46 = tpu.matmul %23, %45, %cst_18 {dimension_numbers = #tpu.dot_dimension_numbers<[1], [0], [0], [1], [0, 0, 1, 1], [], []>} : vector<3x32xf32>, vector<32x128xf32>, vector<3x128xf32> -> vector<3x128xf32>
    %47 = vector.broadcast %24 : vector<3x1xf32> to vector<3x128xf32>
    %48 = arith.addf %46, %47 : vector<3x128xf32>
    %c0_19 = arith.constant 0 : index
    %c0_20 = arith.constant 0 : index
    %49 = vector.load %arg3[%c0_19, %c0_20] : memref<3x128xf32, #tpu.memory_space<vmem>>, vector<3x128xf32>
    tpu.vector_store %arg3[%c0_19, %c0_20], %48 {strides = array<i32>} : memref<3x128xf32, #tpu.memory_space<vmem>>, vector<3x128xf32>,
    return
  }
  func.func @transform_0(%arg0: i32) -> (i32, i32) {
    %c0_i32 = arith.constant 0 : i32
    %c0_i32_0 = arith.constant 0 : i32
    return %c0_i32, %arg0 : i32, i32
  }
  func.func @transform_1(%arg0: i32) -> (i32, i32) {
    %c0_i32 = arith.constant 0 : i32
    %c0_i32_0 = arith.constant 0 : i32
    %c0_i32_1 = arith.constant 0 : i32
    return %c0_i32, %c0_i32_0 : i32, i32
  }
  func.func @transform_2(%arg0: i32) -> (i32, i32) {
    %c0_i32 = arith.constant 0 : i32
    %c0_i32_0 = arith.constant 0 : i32
    return %c0_i32, %arg0 : i32, i32
  }
}

</mosaic_0001>

<llo_original>
// kernel: tpu_custom_call.1
$region0: #{tpu_custom_call.1}
  #allocation0 [shape = 'u32[]', space=smem, size = 0x4, offset = 0x4, fixed_abs, tag = 'smem constant byte address 0x4 - core index']
  #allocation1 [shape = 'u32[144,128]{1,0:T(1,128)}', space=vmem, size = 0x12000, scoped, tag = 'internal scratch']
  %s0 = inlined_call_operand.hbm [shape: f32[3,128], index: 0, kind: input, shape index: {}]
  %s1 = inlined_call_operand.hbm [shape: f32[40,40], index: 1, kind: input, shape index: {}]
  %s2 = inlined_call_operand.hbm [shape: f32[3,128], index: 2, kind: output, shape index: {}]
  %s3 = sld [smem:[#allocation0]]
  $region26: #{tpu_custom_call.1} parent=0
    _
  %s5 = ssub.s32 1, %s3
  %s6 = scalar_select 0, %s5, %s3
  $region1: #{tpu_custom_call.1} parent=0
    #allocation2 [shape = 'u8[2048]{0}', space=vmem, size = 0x800, scoped, tag = 'input window, operand 0, single buffered']
    #allocation3 [shape = 's32[1]{0}', space=sflag, size = 0x4, scoped, tag = 'scoped memory for tpu_custom_call.1']
    #allocation4 [shape = 's32[1]{0}', space=sflag, size = 0x4, scoped, tag = 'scoped memory for tpu_custom_call.1']
    #allocation5 [shape = 'u8[20480]{0}', space=vmem, size = 0x5000, scoped, tag = 'input window, operand 1, single buffered']
    #allocation6 [shape = 's32[1]{0}', space=sflag, size = 0x4, scoped, tag = 'scoped memory for tpu_custom_call.1']
    #allocation7 [shape = 'u8[2048]{0}', space=vmem, size = 0x800, scoped, tag = 'output window, operand 0, single buffered']
    %7 = vsyncpa [#allocation3], 0
    %8 = vsyncpa [#allocation6], 0
    %9 = vsyncpa [#allocation4], 0
    // Predicated region
    $region2: #{tpu_custom_call.1} parent=1 // pred_check
      _
    $region3: #{tpu_custom_call.1} parent=1 // pred_check_branch
      %11 = sbr.rel (0) target = $region5
    $region4: #{tpu_custom_call.1} parent=1 // pred_region
      %s13 = ssub.s32 64, 64
      %14 = vsyncadd [#allocation3], %s13
      %s16 = sshll.u32 [#allocation2], 4
      %s17 = int_to_ptr.vmem [resolvable:$true] %s16
      %19 = dma.hbm_to_vmem [thread:$0]  %s0, 64, %s17, [#allocation3]
    $region5: #{tpu_custom_call.1} parent=1 // pred_fallthru
      _
    // Predicated region
    $region6: #{tpu_custom_call.1} parent=1 // pred_check
      _
    $region7: #{tpu_custom_call.1} parent=1 // pred_check_branch
      %21 = sbr.rel (0) target = $region9
    $region8: #{tpu_custom_call.1} parent=1 // pred_region
      %s23 = ssub.s32 640, 640
      %24 = vsyncadd [#allocation6], %s23
      %s25 = sshll.u32 [#allocation5], 4
      %s26 = int_to_ptr.vmem [resolvable:$true] %s25
      %31 = dma.hbm_to_vmem [thread:$0]  %s1, 640, %s26, [#allocation6], 128, 128, 8
    $region9: #{tpu_custom_call.1} parent=1 // pred_fallthru
      _
    // Predicated region
    $region10: #{tpu_custom_call.1} parent=1 // pred_check
      _
    $region11: #{tpu_custom_call.1} parent=1 // pred_check_branch
      %33 = sbr.rel (0) target = $region13
    $region12: #{tpu_custom_call.1} parent=1 // pred_region
      %34 = dma.done [#allocation3], 64
    $region13: #{tpu_custom_call.1} parent=1 // pred_fallthru
      _
    // Predicated region
    $region14: #{tpu_custom_call.1} parent=1 // pred_check
      _
    $region15: #{tpu_custom_call.1} parent=1 // pred_check_branch
      %36 = sbr.rel (0) target = $region17
    $region16: #{tpu_custom_call.1} parent=1 // pred_region
      %37 = dma.done [#allocation6], 640
    $region17: #{tpu_custom_call.1} parent=1 // pred_fallthru
      _
    %v38 = vld [vmem:[#allocation2] sm:$0x1]
    %v39 = vld [vmem:[#allocation2 + $0x1] sm:$0x1]
    %v40 = vld [vmem:[#allocation2 + $0x2] sm:$0x1]
    %v41 = vand.u32 2147483647, %v40
    %vm42 = vcmp.le.f32.partialorder %v41, 0.7853982
    %vm43 = vcmp.lt.s32.totalorder %v40, 0
    %v44 = vand.u32 %v40, 2139095040
    %v45 = vshrl.u32 %v44, 23
    %v46 = vsub.s32 %v45, 127
    %v47 = vand.u32 2147483647, %v40
    %v48 = vand.u32 %v47, 8388607
    %v49 = vor.u32 %v48, 8388608
    %v50 = vsub.s32 0, %v49
    %v51 = vadd.s32 %v46, 1
    %vm52 = vcmp.gt.s32.totalorder %v51, 0
    %v53 = vsel %vm52, %v51, 0
    %v54 = vshrl.u32 %v53, 5
    %v55 = vand.u32 %v53, 31
    %v56 = vsub.s32 32, %v55
    %v57 = vshrl.u32 683565275, %v56
    %v58 = vshll.u32 683565275, %v55
    %v59 = vshrl.u32 2475754826, %v56
    %v60 = vor.u32 %v58, %v59
    %v61 = vshll.u32 2475754826, %v55
    %v62 = vshrl.u32 2131351028, %v56
    %v63 = vor.u32 %v61, %v62
    %v64 = vshll.u32 2131351028, %v55
    %v65 = vshrl.u32 2102212464, %v56
    %v66 = vor.u32 %v64, %v65
    %v67 = vshll.u32 2102212464, %v55
    %v68 = vshrl.u32 920167782, %v56
    %v69 = vor.u32 %v67, %v68
    %v70 = vshll.u32 920167782, %v55
    %v71 = vshrl.u32 1326507024, %v56
    %v72 = vor.u32 %v70, %v71
    %vm73 = vcmp.lt.s32.totalorder %v54, 1
    %vm74 = vcmp.lt.s32.totalorder %v54, 2
    %vm75 = vcmp.lt.s32.totalorder %v54, 3
    %vm76 = vcmp.lt.s32.totalorder %v54, 4
    %v77 = vsel %vm73, %v57, %v60
    %v78 = vsel %vm76, %v66, 2102212464
    %v79 = vsel %vm75, %v63, %v78
    %v80 = vsel %vm74, %v77, %v79
    %v81 = vsel %vm73, %v60, %v63
    %v82 = vsel %vm76, %v69, 920167782
    %v83 = vsel %vm75, %v66, %v82
    %v84 = vsel %vm74, %v81, %v83
    %v85 = vsel %vm73, %v63, %v66
    %v86 = vsel %vm76, %v72, 1326507024
    %v87 = vsel %vm75, %v69, %v86
    %v88 = vsel %vm74, %v85, %v87
    %v89 = vshll.u32 %v49, 8
    %v90 = vmul.u32.u64.compose %v89, %v88
    %v91 = vextract.low.u32 %v90
    %v92 = vextract.high.u32 %v90
    %v93 = vmul.u32.u64.compose %v89, %v84
    %v94 = vextract.low.u32 %v93
    %v95 = vextract.high.u32 %v93
    %v96 = vmul.u32 %v89, %v80
    %v97 = vadd.s32 %v92, %v94
    %vm98 = vc.u32 %v92, %v94
    %v99 = vadd.s32 %v95, 1
    %v100 = vsel %vm98, %v99, %v95
    %v101 = vadd.s32 %v96, %v100
    %v102 = vadd.s32 %v101, 536870912
    %v103 = vshrl.u32 %v102, 30
    %v104 = vshll.u32 %v103, 30
    %v105 = vsub.s32 %v101, %v104
    %vm106 = vcmp.lt.s32.totalorder %v105, 0
    %v107 = vsub.s32 0, %v105
    %v108 = vsel %vm106, %v107, %v105
    %v109 = vclz %v108
    %v110 = vsub.s32 %v109, 2
    %vm111 = vcmp.gt.s32.totalorder 0, %v110
    %v112 = vsel %vm111, 0, %v110
    %v113 = vsub.s32 32, %v112
    %v114 = vshll.u32 %v105, %v112
    %v115 = vshrl.u32 %v97, %v113
    %v116 = vor.u32 %v114, %v115
    %v117 = vsub.s32 4294967266, %v112
    %v118 = vadd.s32 %v117, 127
    %v119 = vshll.u32 %v118, 23
    %v120 = vor.u32 4788187, %v119
    %v121 = vand.u32 2147483647, %v120
    %v123 = vcvt.s32.f32 %v116
    %v124 = vmul.f32 %v123, %v121
    %v125 = vxor.u32 %v124, 2147483648
    %v126 = vsel %vm43, %v125, %v124
    %v127 = vsub.s32 4, %v103
    %v128 = vsel %vm43, %v127, %v103
    %v129 = vsel %vm42, %v40, %v126
    %v130 = vsel %vm42, 0, %v128
    %v131 = vcosq.f32.pop %v129
    %v132 = vsinq.f32.pop %v129
    %vm133 = vweird.f32 %v40
    %v134 = vadd.s32 %v130, 3
    %v135 = vand.u32 %v134, 3
    %vm136 = vcmp.lt.s32.totalorder %v135, 2
    %vm137 = vcmp.eq.s32.totalorder %v135, 0
    %v138 = vxor.u32 %v132, 2147483648
    %v139 = vsel %vm137, %v131, %v138
    %vm140 = vcmp.eq.s32.totalorder %v135, 2
    %v141 = vxor.u32 %v131, 2147483648
    %v142 = vsel %vm140, %v141, %v132
    %v143 = vsel %vm136, %v139, %v142
    %v144 = vsel %vm133, nan, %v143
    %v145 = vmul.f32 %v39, -1.1111112
    %v146 = vmul.f32 %v144, -0.30864197
    %v147 = vadd.f32 %v145, %v146
    %v148 = vadd.f32 %v38, %v39
    %v149 = vmul.f32 %v144, 0.17777778
    %v150 = vadd.f32 %v148, %v149
    %v151 = vmul.f32 %v150, 1.01
    %v152 = vsub.f32 2.0, %v151
    %v153 = vld [vmem:[#allocation5] sm:$0xff]
    %v154 = vld [vmem:[#allocation5 + $0x8] sm:$0xff]
    %v155 = vld [vmem:[#allocation5 + $0x10] sm:$0xff]
    %v156 = vld [vmem:[#allocation5 + $0x18] sm:$0xff]
    %v157 = vld [vmem:[#allocation5 + $0x20] sm:$0x7]
    %159 = vset.pattern.permute.xlu0 32
    %160 = vperm.xlu0 %159, %v153
    %v161 = vpop.permute.xlu0 %160
    %164 = vset.pattern.permute.xlu0 32
    %165 = vperm.xlu0 %164, %v154
    %v166 = vpop.permute.xlu0 %165
    %169 = vset.pattern.permute.xlu0 32
    %170 = vperm.xlu0 %169, %v155
    %v171 = vpop.permute.xlu0 %170
    %174 = vset.pattern.permute.xlu0 32
    %175 = vperm.xlu0 %174, %v156
    %v176 = vpop.permute.xlu0 %175
    %v178 = vlaneseq
    %v179 = vshrl.u32 %v178, 7
    %v180 = vsub.s32 0, %v179
    %v181 = vrot.slane %v144, %v180
    %v182 = vmul.f32 %v161, %v181
    %v183 = vmul.f32 %v166, %v181
    %v184 = vmul.f32 %v171, %v181
    %v185 = vmul.f32 %v176, %v181
    %186 = vset.pattern.permute.xlu0 33
    %187 = vperm.xlu0 %186, %v153
    %v188 = vpop.permute.xlu0 %187
    %190 = vset.pattern.permute.xlu0 33
    %191 = vperm.xlu0 %190, %v154
    %v192 = vpop.permute.xlu0 %191
    %194 = vset.pattern.permute.xlu0 33
    %195 = vperm.xlu0 %194, %v155
    %v196 = vpop.permute.xlu0 %195
    %198 = vset.pattern.permute.xlu0 33
    %199 = vperm.xlu0 %198, %v156
    %v200 = vpop.permute.xlu0 %199
    %v202 = vlaneseq
    %v203 = vshrl.u32 %v202, 7
    %v204 = vsub.s32 0, %v203
    %v205 = vrot.slane %v147, %v204
    %v206 = vmul.f32 %v188, %v205
    %v207 = vmul.f32 %v192, %v205
    %v208 = vmul.f32 %v196, %v205
    %v209 = vmul.f32 %v200, %v205
    %v210 = vadd.f32 %v182, %v206
    %v211 = vadd.f32 %v183, %v207
    %v212 = vadd.f32 %v184, %v208
    %v213 = vadd.f32 %v185, %v209
    %214 = vset.pattern.permute.xlu0 34
    %215 = vperm.xlu0 %214, %v153
    %v216 = vpop.permute.xlu0 %215
    %218 = vset.pattern.permute.xlu0 34
    %219 = vperm.xlu0 %218, %v154
    %v220 = vpop.permute.xlu0 %219
    %222 = vset.pattern.permute.xlu0 34
    %223 = vperm.xlu0 %222, %v155
    %v224 = vpop.permute.xlu0 %223
    %226 = vset.pattern.permute.xlu0 34
    %227 = vperm.xlu0 %226, %v156
    %v228 = vpop.permute.xlu0 %227
    %v230 = vlaneseq
    %v231 = vshrl.u32 %v230, 7
    %v232 = vsub.s32 0, %v231
    %v233 = vrot.slane %v152, %v232
    %v234 = vmul.f32 %v216, %v233
    %v235 = vmul.f32 %v220, %v233
    %v236 = vmul.f32 %v224, %v233
    %v237 = vmul.f32 %v228, %v233
    %v238 = vadd.f32 %v210, %v234
    %v239 = vadd.f32 %v211, %v235
    %v240 = vadd.f32 %v212, %v236
    %v241 = vadd.f32 %v213, %v237
    %242 = vset.pattern.permute.xlu0 35
    %243 = vperm.xlu0 %242, %v153
    %v244 = vpop.permute.xlu0 %243
    %246 = vset.pattern.permute.xlu0 35
    %247 = vperm.xlu0 %246, %v154
    %v248 = vpop.permute.xlu0 %247
    %250 = vset.pattern.permute.xlu0 35
    %251 = vperm.xlu0 %250, %v155
    %v252 = vpop.permute.xlu0 %251
    %254 = vset.pattern.permute.xlu0 35
    %255 = vperm.xlu0 %254, %v156
    %v256 = vpop.permute.xlu0 %255
    %v258 = vadd.f32 %v238, %v244
    %v259 = vadd.f32 %v239, %v248
    %v260 = vadd.f32 %v240, %v252
    %v261 = vadd.f32 %v241, %v256
    %v262 = vtanh.pop %v258
    %v263 = vtanh.pop %v259
    %v264 = vtanh.pop %v260
    %v265 = vtanh.pop %v261
    %266 = vset.pattern.permute.xlu0 36
    %267 = vperm.xlu0 %266, %v153
    %v268 = vpop.permute.xlu0 %267
    %270 = vset.pattern.permute.xlu0 36
    %271 = vperm.xlu0 %270, %v154
    %v272 = vpop.permute.xlu0 %271
    %274 = vset.pattern.permute.xlu0 36
    %275 = vperm.xlu0 %274, %v155
    %v276 = vpop.permute.xlu0 %275
    %278 = vset.pattern.permute.xlu0 36
    %279 = vperm.xlu0 %278, %v156
    %v280 = vpop.permute.xlu0 %279
    %vm282 = vcmask 261120
    %v283 = vsel %vm282, %v153, 0
    %v285 = vsel %vm282, %v154, 0
    %v287 = vsel %vm282, %v155, 0
    %v289 = vsel %vm282, %v156, 0
    %291 = vmatprep.subr.mxu0 0.0
    %292 = vmatpush1.msra.mxu0 %v262
    %293 = vmatprep.subr.mxu0 0.0
    %294 = vmatpush1.msra.mxu0 %v263
    %295 = vmatprep.subr.mxu0 0.0
    %296 = vmatpush1.msra.mxu0 %v264
    %297 = vmatprep.subr.mxu0 0.0
    %298 = vmatpush1.msra.mxu0 %v265
    %299 = vmatprep.subr.mxu0 0.0
    %300 = vmatpush1.msra.mxu0 0.0
    %301 = vmatprep.subr.mxu0 0.0
    %302 = vmatpush1.msra.mxu0 0.0
    %303 = vmatprep.subr.mxu0 0.0
    %304 = vmatpush1.msra.mxu0 0.0
    %305 = vmatprep.subr.mxu0 0.0
    %306 = vmatpush1.msra.mxu0 0.0
    %307 = vmatprep.subr.mxu0 0.0
    %308 = vmatpush1.msra.mxu0 0.0
    %309 = vmatprep.subr.mxu0 0.0
    %310 = vmatpush1.msra.mxu0 0.0
    %311 = vmatprep.subr.mxu0 0.0
    %312 = vmatpush1.msra.mxu0 0.0
    %313 = vmatprep.subr.mxu0 0.0
    %314 = vmatpush1.msra.mxu0 0.0
    %315 = vmatprep.subr.mxu0 0.0
    %316 = vmatpush1.msra.mxu0 0.0
    %317 = vmatprep.subr.mxu0 0.0
    %318 = vmatpush1.msra.mxu0 0.0
    %319 = vmatprep.subr.mxu0 0.0
    %320 = vmatpush1.msra.mxu0 0.0
    %321 = vmatprep.subr.mxu0 0.0
    %322 = vmatpush1.msra.mxu0 0.0
    %323 = vmatprep.subr.mxu0 0.0
    %324 = vmatpush1.msra.mxu0 0.0
    %325 = vmatprep.subr.mxu0 0.0
    %326 = vmatpush1.msra.mxu0 0.0
    %327 = vmatprep.subr.mxu0 0.0
    %328 = vmatpush1.msra.mxu0 0.0
    %329 = vmatprep.subr.mxu0 0.0
    %330 = vmatpush1.msra.mxu0 0.0
    %331 = vmatprep.subr.mxu0 0.0
    %332 = vmatpush1.msra.mxu0 0.0
    %333 = vmatprep.subr.mxu0 0.0
    %334 = vmatpush1.msra.mxu0 0.0
    %335 = vmatprep.subr.mxu0 0.0
    %336 = vmatpush1.msra.mxu0 0.0
    %337 = vmatprep.subr.mxu0 0.0
    %338 = vmatpush1.msra.mxu0 0.0
    %339 = vmatprep.subr.mxu0 0.0
    %340 = vmatpush1.msra.mxu0 0.0
    %341 = vmatprep.subr.mxu0 0.0
    %342 = vmatpush1.msra.mxu0 0.0
    %343 = vmatprep.subr.mxu0 0.0
    %344 = vmatpush1.msra.mxu0 0.0
    %345 = vmatprep.subr.mxu0 0.0
    %346 = vmatpush1.msra.mxu0 0.0
    %347 = vmatprep.subr.mxu0 0.0
    %348 = vmatpush1.msra.mxu0 0.0
    %349 = vmatprep.subr.mxu0 0.0
    %350 = vmatpush1.msra.mxu0 0.0
    %351 = vmatprep.subr.mxu0 0.0
    %352 = vmatpush1.msra.mxu0 0.0
    %353 = vmatprep.subr.mxu0 0.0
    %354 = vmatpush1.msra.mxu0 0.0
    %355 = vmatprep.mubr.f32.mxu0 0.0
    %356 = vmatmul.mubr.f32.gmra.mrb[0].mxu0 %v283
    %v357 = vpop.f32.mrb[0].mxu0
    %v358 = vadd.f32 %v268, %v357
    %v359 = vpop.f32.mrb[0].mxu0
    %360 = vmatprep.mubr.f32.mxu0 0.0
    %361 = vmatmul.mubr.f32.gmra.mrb[0].mxu0 %v285
    %v362 = vpop.f32.mrb[0].mxu0
    %v363 = vadd.f32 %v272, %v362
    %v364 = vpop.f32.mrb[0].mxu0
    %365 = vmatprep.mubr.f32.mxu0 0.0
    %366 = vmatmul.mubr.f32.gmra.mrb[0].mxu0 %v287
    %v367 = vpop.f32.mrb[0].mxu0
    %v368 = vadd.f32 %v276, %v367
    %v369 = vpop.f32.mrb[0].mxu0
    %370 = vmatprep.mubr.f32.mxu0 0.0
    %371 = vmatmul.mubr.f32.gmra.mrb[0].mxu0 %v289
    %v372 = vpop.f32.mrb[0].mxu0
    %v373 = vadd.f32 %v280, %v372
    %v374 = vpop.f32.mrb[0].mxu0
    %375 = vdwg.mxu0
    %v376 = vtanh.pop %v358
    %v377 = vtanh.pop %v363
    %v378 = vtanh.pop %v368
    %v379 = vtanh.pop %v373
    %381 = vset.pattern.permute.xlu0 36
    %382 = vperm.xlu0 %381, %v157
    %v383 = vpop.permute.xlu0 %382
    %v385 = vsel %vm282, %v157, 0
    %387 = vmatprep.subr.mxu0 0.0
    %388 = vmatpush1.msra.mxu0 %v376
    %389 = vmatprep.subr.mxu0 0.0
    %390 = vmatpush1.msra.mxu0 %v377
    %391 = vmatprep.subr.mxu0 0.0
    %392 = vmatpush1.msra.mxu0 %v378
    %393 = vmatprep.subr.mxu0 0.0
    %394 = vmatpush1.msra.mxu0 %v379
    %395 = vmatprep.subr.mxu0 0.0
    %396 = vmatpush1.msra.mxu0 0.0
    %397 = vmatprep.subr.mxu0 0.0
    %398 = vmatpush1.msra.mxu0 0.0
    %399 = vmatprep.subr.mxu0 0.0
    %400 = vmatpush1.msra.mxu0 0.0
    %401 = vmatprep.subr.mxu0 0.0
    %402 = vmatpush1.msra.mxu0 0.0
    %403 = vmatprep.subr.mxu0 0.0
    %404 = vmatpush1.msra.mxu0 0.0
    %405 = vmatprep.subr.mxu0 0.0
    %406 = vmatpush1.msra.mxu0 0.0
    %407 = vmatprep.subr.mxu0 0.0
    %408 = vmatpush1.msra.mxu0 0.0
    %409 = vmatprep.subr.mxu0 0.0
    %410 = vmatpush1.msra.mxu0 0.0
    %411 = vmatprep.subr.mxu0 0.0
    %412 = vmatpush1.msra.mxu0 0.0
    %413 = vmatprep.subr.mxu0 0.0
    %414 = vmatpush1.msra.mxu0 0.0
    %415 = vmatprep.subr.mxu0 0.0
    %416 = vmatpush1.msra.mxu0 0.0
    %417 = vmatprep.subr.mxu0 0.0
    %418 = vmatpush1.msra.mxu0 0.0
    %419 = vmatprep.subr.mxu0 0.0
    %420 = vmatpush1.msra.mxu0 0.0
    %421 = vmatprep.subr.mxu0 0.0
    %422 = vmatpush1.msra.mxu0 0.0
    %423 = vmatprep.subr.mxu0 0.0
    %424 = vmatpush1.msra.mxu0 0.0
    %425 = vmatprep.subr.mxu0 0.0
    %426 = vmatpush1.msra.mxu0 0.0
    %427 = vmatprep.subr.mxu0 0.0
    %428 = vmatpush1.msra.mxu0 0.0
    %429 = vmatprep.subr.mxu0 0.0
    %430 = vmatpush1.msra.mxu0 0.0
    %431 = vmatprep.subr.mxu0 0.0
    %432 = vmatpush1.msra.mxu0 0.0
    %433 = vmatprep.subr.mxu0 0.0
    %434 = vmatpush1.msra.mxu0 0.0
    %435 = vmatprep.subr.mxu0 0.0
    %436 = vmatpush1.msra.mxu0 0.0
    %437 = vmatprep.subr.mxu0 0.0
    %438 = vmatpush1.msra.mxu0 0.0
    %439 = vmatprep.subr.mxu0 0.0
    %440 = vmatpush1.msra.mxu0 0.0
    %441 = vmatprep.subr.mxu0 0.0
    %442 = vmatpush1.msra.mxu0 0.0
    %443 = vmatprep.subr.mxu0 0.0
    %444 = vmatpush1.msra.mxu0 0.0
    %445 = vmatprep.subr.mxu0 0.0
    %446 = vmatpush1.msra.mxu0 0.0
    %447 = vmatprep.subr.mxu0 0.0
    %448 = vmatpush1.msra.mxu0 0.0
    %449 = vmatprep.subr.mxu0 0.0
    %450 = vmatpush1.msra.mxu0 0.0
    %451 = vmatprep.mubr.f32.mxu0 0.0
    %452 = vmatmul.mubr.f32.gmra.mrb[0].mxu0 %v385
    %v453 = vpop.f32.mrb[0].mxu0
    %v454 = vadd.f32 %v383, %v453
    %v455 = vpop.f32.mrb[0].mxu0
    %456 = vdwg.mxu0
    %457 = vst [vmem:[#allocation7] sm:$0x7] %v454
    // Predicated region
    $region18: #{tpu_custom_call.1} parent=1 // pred_check
      _
    $region19: #{tpu_custom_call.1} parent=1 // pred_check_branch
      %459 = sbr.rel (0) target = $region21
    $region20: #{tpu_custom_call.1} parent=1 // pred_region
      %s461 = ssub.s32 64, 64
      %462 = vsyncadd [#allocation4], %s461
      %s464 = sshll.u32 [#allocation7], 4
      %s465 = int_to_ptr.vmem [resolvable:$true] %s464
      %467 = dma.vmem_to_hbm [thread:$0]  %s465, 64, %s2, [#allocation4]
    $region21: #{tpu_custom_call.1} parent=1 // pred_fallthru
      _
    // Predicated region
    $region22: #{tpu_custom_call.1} parent=1 // pred_check
      _
    $region23: #{tpu_custom_call.1} parent=1 // pred_check_branch
      %469 = sbr.rel (0) target = $region25
    $region24: #{tpu_custom_call.1} parent=1 // pred_region
      %470 = dma.done [#allocation4], 64
    $region25: #{tpu_custom_call.1} parent=1 // pred_fallthru
      _
    %471 = vsyncpa [#allocation3], 1
    %472 = vsyncpa [#allocation6], 1
    %473 = vsyncpa [#allocation4], 1

</llo_original>
